<compile_context>
chip_gen: v5e
topology: v5e:2x2
jax: 0.10.0
libtpu: 0.0.40
codegen_flags: <defaults>
</compile_context>

<pallas_src>
import functools

import jax
import jax.numpy as jnp
from jax.experimental import pallas as pl
from jax.experimental.pallas import tpu as pltpu

EPS = 1e-5  # nn.LayerNorm default
_MIB = 1024 * 1024


def _cdiv(a, b):
    return -(-a // b)


def _round_up(x, m):
    return ((x + m - 1) // m) * m


def _sublane(dtype):
    # sub-32-bit dtypes pack along sublanes: bf16 -> 16, int8/fp8 -> 32
    return {1: 32, 2: 16}.get(jnp.dtype(dtype).itemsize, 8)


def _vmem_budget_bytes():
    try:
        phys = int(pltpu.get_tpu_info().vmem_capacity_bytes)
    except Exception:
        phys = 64 * _MIB  # unknown -> be conservative
    if phys <= 64 * _MIB:
        return 52 * _MIB   # v7x: 64 MiB/TC physical, leave headroom for Mosaic scratch
    return 100 * _MIB      # v5e / v6e: 128 MiB physical


def _choose_row_tile(n_rows, bytes_per_row, vmem_avail, sublane):
    t = (max(vmem_avail, 0) // max(bytes_per_row, 1)) // sublane * sublane
    t = max(sublane, min(t, 8192))
    t = min(t, _round_up(n_rows, sublane))
    if n_rows > sublane:  # >= 2 grid steps so the "parallel" axis can use both v7x cores
        t = min(t, _round_up(_cdiv(n_rows, 2), sublane))
    return t


def _layer_norm_f32(x_f32, gamma, beta, *, inv_d, d_valid, d_block):
    # Two-pass statistics: mean first, then variance of the centered values.
    mean = jnp.sum(x_f32, axis=-1, keepdims=True) * inv_d
    xc = x_f32 - mean
    if d_block != d_valid:
        # Lane-padded columns must not contribute to the variance.
        lane = jax.lax.broadcasted_iota(jnp.int32, xc.shape, dimension=1)
        xc = jnp.where(lane < d_valid, xc, 0.0)
    var = jnp.sum(xc * xc, axis=-1, keepdims=True) * inv_d
    return xc * jax.lax.rsqrt(var + EPS) * gamma + beta


def _prenorm_linear_kernel(x_ref, gamma_ref, beta_ref, w_ref, b_ref, o_ref,
                           *, inv_d, d_valid, d_block):
    # x: (TILE_N, Dblk); gamma/beta/b: (1, Dblk) f32; W resident: (Dblk, Dblk).
    y = _layer_norm_f32(x_ref[...].astype(jnp.float32), gamma_ref[...], beta_ref[...],
                        inv_d=inv_d, d_valid=d_valid, d_block=d_block)
    out = jnp.dot(y.astype(w_ref.dtype), w_ref[...],
                  preferred_element_type=jnp.float32) + b_ref[...]
    o_ref[...] = out.astype(o_ref.dtype)


def _prenorm_linear_coltiled_kernel(x_ref, gamma_ref, beta_ref, w_ref, b_ref, o_ref,
                                    y_ref, *, inv_d, d_valid, d_block):
    # Column-tiled W path: LN computed once per row tile (col==0), cached in VMEM
    # scratch, reused for every (Dblk, TILE_C) slab of W.
    @pl.when(pl.program_id(1) == 0)
    def _():
        y = _layer_norm_f32(x_ref[...].astype(jnp.float32), gamma_ref[...], beta_ref[...],
                            inv_d=inv_d, d_valid=d_valid, d_block=d_block)
        y_ref[...] = y.astype(y_ref.dtype)

    out = jnp.dot(y_ref[...], w_ref[...],
                  preferred_element_type=jnp.float32) + b_ref[...]
    o_ref[...] = out.astype(o_ref.dtype)


def prenorm_linear(x, gamma, beta, w, b, *, w_compute_dtype=None, col_tile=None):
    """PreNorm with fn = Linear: out = LayerNorm(x) @ w + b.  x: (..., D) -> (..., D)."""
    *lead, D = x.shape
    D = int(D)
    N = 1
    for s in lead:
        N *= int(s)

    aligned = (D % 128 == 0)
    d_blk = D if aligned else _round_up(D, 128)
    sub = _sublane(x.dtype)

    w_dtype = jnp.dtype(w_compute_dtype) if w_compute_dtype is not None else jnp.dtype(w.dtype)

    x2 = x.reshape(N, D)
    if aligned:
        # Fast path: no padding passes over x / params at all.
        x_in = x2
        gamma_in = gamma.astype(jnp.float32).reshape(1, D)
        beta_in = beta.astype(jnp.float32).reshape(1, D)
        b_in = b.astype(jnp.float32).reshape(1, D)
        w_in = w.astype(w_dtype)
    else:
        # Lane-pad to a multiple of 128 only when D is not lane-aligned (rare).
        x_in = jnp.zeros((N, d_blk), x.dtype).at[:, :D].set(x2)
        gamma_in = jnp.zeros((1, d_blk), jnp.float32).at[0, :D].set(gamma.astype(jnp.float32))
        beta_in = jnp.zeros((1, d_blk), jnp.float32).at[0, :D].set(beta.astype(jnp.float32))
        b_in = jnp.zeros((1, d_blk), jnp.float32).at[0, :D].set(b.astype(jnp.float32))
        w_in = jnp.zeros((d_blk, d_blk), w_dtype).at[:D, :D].set(w.astype(w_dtype))

    x_isz = jnp.dtype(x.dtype).itemsize
    o_isz = x_isz
    w_isz = w_dtype.itemsize

    vmem_cap = _vmem_budget_bytes()
    headroom = 6 * _MIB                              # Mosaic internal scratch / semaphores
    w_resident_bytes = 2 * d_blk * d_blk * w_isz     # 2x: constant-index operand still double-buffered

    use_col_path = (col_tile is not None) or (w_resident_bytes > int(0.45 * vmem_cap))
    kernel_kwargs = dict(inv_d=1.0 / D, d_valid=D, d_block=d_blk)

    if not use_col_path:
        # Resident-W path: 1-D grid over rows, W / gamma / beta / b stay in VMEM.
        per_row = 2 * d_blk * (x_isz + o_isz) + 2 * d_blk * 4  # dbl-buffered x/out + f32 working set
        avail = vmem_cap - headroom - w_resident_bytes
        tile_n = _choose_row_tile(N, per_row, avail, sub)

        out = pl.pallas_call(
            functools.partial(_prenorm_linear_kernel, **kernel_kwargs),
            out_shape=jax.ShapeDtypeStruct((N, d_blk), x.dtype),
            grid=(_cdiv(N, tile_n),),
            in_specs=[
                pl.BlockSpec((tile_n, d_blk), lambda i: (i, 0)),   # x: streamed row tiles
                pl.BlockSpec((1, d_blk), lambda i: (0, 0)),        # gamma: resident
                pl.BlockSpec((1, d_blk), lambda i: (0, 0)),        # beta: resident
                pl.BlockSpec((d_blk, d_blk), lambda i: (0, 0)),    # W: resident
                pl.BlockSpec((1, d_blk), lambda i: (0, 0)),        # b: resident
            ],
            out_specs=pl.BlockSpec((tile_n, d_blk), lambda i: (i, 0)),
            compiler_params=pltpu.CompilerParams(
                dimension_semantics=("parallel",),
                vmem_limit_bytes=vmem_cap,
            ),
        )(x_in, gamma_in, beta_in, w_in, b_in)
    else:
        # Column-tiled W path for large D (required on v7x's 64 MiB VMEM).
        tile_c = col_tile if col_tile is not None else min(d_blk, 512)
        tile_c = max(128, (int(tile_c) // 128) * 128)
        while tile_c > 128 and 2 * d_blk * tile_c * w_isz > int(0.5 * (vmem_cap - headroom)):
            tile_c = max(128, ((tile_c // 2) // 128) * 128)

        w_cols_bytes = 2 * d_blk * tile_c * w_isz
        per_row = (d_blk * w_isz            # cached LN(y) scratch (W compute dtype)
                   + 2 * d_blk * x_isz      # double-buffered x rows
                   + 2 * tile_c * o_isz     # double-buffered out tile
                   + 2 * d_blk * 4)         # f32 LN working set
        avail = vmem_cap - headroom - w_cols_bytes
        tile_n = _choose_row_tile(N, per_row, avail, sub)

        out = pl.pallas_call(
            functools.partial(_prenorm_linear_coltiled_kernel, **kernel_kwargs),
            out_shape=jax.ShapeDtypeStruct((N, d_blk), x.dtype),
            grid=(_cdiv(N, tile_n), _cdiv(d_blk, tile_c)),
            in_specs=[
                pl.BlockSpec((tile_n, d_blk), lambda i, j: (i, 0)),  # x: constant over j -> fetched once/row tile
                pl.BlockSpec((1, d_blk), lambda i, j: (0, 0)),       # gamma
                pl.BlockSpec((1, d_blk), lambda i, j: (0, 0)),       # beta
                pl.BlockSpec((d_blk, tile_c), lambda i, j: (0, j)),  # W: output-column slabs
                pl.BlockSpec((1, tile_c), lambda i, j: (0, j)),      # b: matching column slab
            ],
            out_specs=pl.BlockSpec((tile_n, tile_c), lambda i, j: (i, j)),
            scratch_shapes=[pltpu.VMEM((tile_n, d_blk), w_dtype)],   # cached LN(y)
            compiler_params=pltpu.CompilerParams(
                dimension_semantics=("parallel", "arbitrary"),
                vmem_limit_bytes=vmem_cap,
            ),
        )(x_in, gamma_in, beta_in, w_in, b_in)

    if not aligned:
        out = out[:, :D]
    return out.reshape(tuple(lead) + (D,))


def _reference(x, gamma, beta, w, b):
    xf = x.astype(jnp.float32)
    mean = jnp.mean(xf, axis=-1, keepdims=True)
    var = jnp.mean((xf - mean) ** 2, axis=-1, keepdims=True)
    y = (xf - mean) * jax.lax.rsqrt(var + EPS) * gamma + beta
    return (y @ w.astype(jnp.float32) + b).astype(x.dtype)


if __name__ == "__main__":
    key = jax.random.PRNGKey(0)

    # Small shapes, one per kernel path:
    #  - D=32  : lane-padded path + masked variance
    #  - D=128 : aligned fast path (no padding passes) + clipped partial row block (N=14)
    #  - D=256 : forced column-tiled W path (2 column tiles)
    cases = [
        (2, 8, 32, {}),
        (2, 7, 128, {}),
        (2, 8, 256, {"col_tile": 128}),
    ]

    for idx, (B, S, D, extra) in enumerate(cases):
        key, sub = jax.random.split(key)
        kx, kg, kbe, kw, kbias = jax.random.split(sub, 5)
        # Non-centered inputs stress the two-pass variance.
        x = jax.random.normal(kx, (B, S, D), dtype=jnp.float32) + 1.5
        gamma = 1.0 + 0.1 * jax.random.normal(kg, (D,), dtype=jnp.float32)
        beta = 0.1 * jax.random.normal(kbe, (D,), dtype=jnp.float32)
        w = jax.random.normal(kw, (D, D), dtype=jnp.float32) / jnp.sqrt(D)
        b = 0.01 * jax.random.normal(kbias, (D,), dtype=jnp.float32)

        out = jax.block_until_ready(prenorm_linear(x, gamma, beta, w, b, **extra))
        ref = _reference(x, gamma, beta, w, b)

        assert out.shape == (B, S, D), f"case {idx}: bad shape {out.shape}"
        err = float(jnp.max(jnp.abs(out - ref)))
        assert jnp.allclose(out, ref, atol=1e-3, rtol=1e-3), f"case {idx}: mismatch, max err {err}"

    print("KERNEL_OK")
</pallas_src>

<mosaic_0001>
module attributes {stable_mosaic.version = 11 : i64} {
  func.func @_prenorm_linear_kernel(%arg0: i32, %arg1: memref<8x128xf32, #tpu.memory_space<vmem>>, %arg2: memref<1x128xf32, #tpu.memory_space<vmem>>, %arg3: memref<1x128xf32, #tpu.memory_space<vmem>>, %arg4: memref<128x128xf32, #tpu.memory_space<vmem>>, %arg5: memref<1x128xf32, #tpu.memory_space<vmem>>, %arg6: memref<8x128xf32, #tpu.memory_space<vmem>>) attributes {dimension_semantics = [#tpu.dimension_semantics<parallel>], iteration_bounds = array<i64: 2>, scalar_prefetch = 0 : i64, scratch_operands = 0 : i64, tpu.core_type = #tpu.core_type<tc>, window_params = [{transform_indices = @transform_0, window_bounds = array<i64: 8, 128>}, {pipeline_mode = #tpu.pipeline_mode<synchronous>, transform_indices = @transform_1, window_bounds = array<i64: 1, 128>}, {pipeline_mode = #tpu.pipeline_mode<synchronous>, transform_indices = @transform_2, window_bounds = array<i64: 1, 128>}, {pipeline_mode = #tpu.pipeline_mode<synchronous>, transform_indices = @transform_3, window_bounds = array<i64: 128, 128>}, {pipeline_mode = #tpu.pipeline_mode<synchronous>, transform_indices = @transform_4, window_bounds = array<i64: 1, 128>}, {transform_indices = @transform_5, window_bounds = array<i64: 8, 128>}]} {
    %c0 = arith.constant 0 : index
    %c0_0 = arith.constant 0 : index
    %0 = vector.load %arg1[%c0, %c0_0] : memref<8x128xf32, #tpu.memory_space<vmem>>, vector<8x128xf32>
    %c0_1 = arith.constant 0 : index
    %c0_2 = arith.constant 0 : index
    %1 = vector.load %arg2[%c0_1, %c0_2] : memref<1x128xf32, #tpu.memory_space<vmem>>, vector<1x128xf32>
    %c0_3 = arith.constant 0 : index
    %c0_4 = arith.constant 0 : index
    %2 = vector.load %arg3[%c0_3, %c0_4] : memref<1x128xf32, #tpu.memory_space<vmem>>, vector<1x128xf32>
    %cst = arith.constant dense<0.000000e+00> : vector<8xf32>
    %3 = vector.multi_reduction <add>, %0, %cst [1] : vector<8x128xf32> to vector<8xf32>
    %4 = vector.shape_cast %3 : vector<8xf32> to vector<8x1xf32>
    %cst_5 = arith.constant 3.125000e-02 : f32
    %5 = vector.broadcast %cst_5 : f32 to vector<8x1xf32>
    %6 = arith.mulf %4, %5 : vector<8x1xf32>
    %7 = vector.broadcast %6 : vector<8x1xf32> to vector<8x128xf32>
    %8 = arith.subf %0, %7 : vector<8x128xf32>
    %9 = tpu.iota {dimensions = array<i32: 1>} : vector<8x128xi32>
    %c32_i32 = arith.constant 32 : i32
    %10 = vector.broadcast %c32_i32 : i32 to vector<8x128xi32>
    %11 = arith.cmpi slt, %9, %10 : vector<8x128xi32>
    %cst_6 = arith.constant 0.000000e+00 : f32
    %12 = vector.broadcast %cst_6 : f32 to vector<8x128xf32>
    %13 = arith.select %11, %8, %12 : vector<8x128xi1>, vector<8x128xf32>
    %14 = arith.mulf %13, %13 : vector<8x128xf32>
    %cst_7 = arith.constant dense<0.000000e+00> : vector<8xf32>
    %15 = vector.multi_reduction <add>, %14, %cst_7 [1] : vector<8x128xf32> to vector<8xf32>
    %16 = vector.shape_cast %15 : vector<8xf32> to vector<8x1xf32>
    %cst_8 = arith.constant 3.125000e-02 : f32
    %17 = vector.broadcast %cst_8 : f32 to vector<8x1xf32>
    %18 = arith.mulf %16, %17 : vector<8x1xf32>
    %cst_9 = arith.constant 9.99999974E-6 : f32
    %19 = vector.broadcast %cst_9 : f32 to vector<8x1xf32>
    %20 = arith.addf %18, %19 : vector<8x1xf32>
    %21 = math.rsqrt %20 : vector<8x1xf32>
    %22 = vector.broadcast %21 : vector<8x1xf32> to vector<8x128xf32>
    %23 = arith.mulf %13, %22 : vector<8x128xf32>
    %24 = vector.broadcast %1 : vector<1x128xf32> to vector<8x128xf32>
    %25 = arith.mulf %23, %24 : vector<8x128xf32>
    %26 = vector.broadcast %2 : vector<1x128xf32> to vector<8x128xf32>
    %27 = arith.addf %25, %26 : vector<8x128xf32>
    %c0_10 = arith.constant 0 : index
    %c0_11 = arith.constant 0 : index
    %28 = vector.load %arg4[%c0_10, %c0_11] : memref<128x128xf32, #tpu.memory_space<vmem>>, vector<128x128xf32>
    %cst_12 = arith.constant dense<0.000000e+00> : vector<8x128xf32>
    %29 = tpu.matmul %27, %28, %cst_12 {dimension_numbers = #tpu.dot_dimension_numbers<[1], [0], [0], [1], [0, 0, 1, 1], [], []>} : vector<8x128xf32>, vector<128x128xf32>, vector<8x128xf32> -> vector<8x128xf32>
    %c0_13 = arith.constant 0 : index
    %c0_14 = arith.constant 0 : index
    %30 = vector.load %arg5[%c0_13, %c0_14] : memref<1x128xf32, #tpu.memory_space<vmem>>, vector<1x128xf32>
    %31 = vector.broadcast %30 : vector<1x128xf32> to vector<8x128xf32>
    %32 = arith.addf %29, %31 : vector<8x128xf32>
    %c0_15 = arith.constant 0 : index
    %c0_16 = arith.constant 0 : index
    %33 = vector.load %arg6[%c0_15, %c0_16] : memref<8x128xf32, #tpu.memory_space<vmem>>, vector<8x128xf32>
    tpu.vector_store %arg6[%c0_15, %c0_16], %32 {strides = array<i32>} : memref<8x128xf32, #tpu.memory_space<vmem>>, vector<8x128xf32>,
    return
  }
  func.func @transform_0(%arg0: i32) -> (i32, i32) {
    %c0_i32 = arith.constant 0 : i32
    %c0_i32_0 = arith.constant 0 : i32
    return %arg0, %c0_i32 : i32, i32
  }
  func.func @transform_1(%arg0: i32) -> (i32, i32) {
    %c0_i32 = arith.constant 0 : i32
    %c0_i32_0 = arith.constant 0 : i32
    %c0_i32_1 = arith.constant 0 : i32
    return %c0_i32, %c0_i32_0 : i32, i32
  }
  func.func @transform_2(%arg0: i32) -> (i32, i32) {
    %c0_i32 = arith.constant 0 : i32
    %c0_i32_0 = arith.constant 0 : i32
    %c0_i32_1 = arith.constant 0 : i32
    return %c0_i32, %c0_i32_0 : i32, i32
  }
  func.func @transform_3(%arg0: i32) -> (i32, i32) {
    %c0_i32 = arith.constant 0 : i32
    %c0_i32_0 = arith.constant 0 : i32
    %c0_i32_1 = arith.constant 0 : i32
    return %c0_i32, %c0_i32_0 : i32, i32
  }
  func.func @transform_4(%arg0: i32) -> (i32, i32) {
    %c0_i32 = arith.constant 0 : i32
    %c0_i32_0 = arith.constant 0 : i32
    %c0_i32_1 = arith.constant 0 : i32
    return %c0_i32, %c0_i32_0 : i32, i32
  }
  func.func @transform_5(%arg0: i32) -> (i32, i32) {
    %c0_i32 = arith.constant 0 : i32
    %c0_i32_0 = arith.constant 0 : i32
    return %arg0, %c0_i32 : i32, i32
  }
}

</mosaic_0001>

<llo_original>
// kernel: tpu_custom_call.1
$region0: #{tpu_custom_call.1}
  #allocation0 [shape = 'u32[]', space=smem, size = 0x4, offset = 0x4, fixed_abs, tag = 'smem constant byte address 0x4 - core index']
  #allocation1 [shape = 'u32[72,128]{1,0:T(1,128)}', space=vmem, size = 0x9000, scoped, tag = 'internal scratch']
  %s0 = inlined_call_operand.hbm [shape: f32[16,128], index: 0, kind: input, shape index: {}]
  %s1 = inlined_call_operand.hbm [shape: f32[1,128], index: 1, kind: input, shape index: {}]
  %s2 = inlined_call_operand.vmem [shape: f32[1,128], index: 2, kind: input, shape index: {}]
  %s3 = inlined_call_operand.hbm [shape: f32[128,128], index: 3, kind: input, shape index: {}]
  %s4 = inlined_call_operand.vmem [shape: f32[1,128], index: 4, kind: input, shape index: {}]
  %s5 = inlined_call_operand.hbm [shape: f32[16,128], index: 5, kind: output, shape index: {}]
  %s6 = sld [smem:[#allocation0]]
  $region65: #{tpu_custom_call.1} parent=0
    _
  %s8 = ssub.s32 1, %s6
  %s9 = scalar_select 0, %s8, %s6
  $region1: #{tpu_custom_call.1} parent=0
    #allocation2 [shape = 'u8[8192]{0}', space=vmem, size = 0x2000, scoped, tag = 'input window, operand 0']
    #allocation3 [shape = 's32[2]{0}', space=sflag, size = 0x8, scoped, tag = 'scoped memory for tpu_custom_call.1']
    #allocation4 [shape = 's32[2]{0}', space=sflag, size = 0x8, scoped, tag = 'scoped memory for tpu_custom_call.1']
    #allocation5 [shape = 'u8[512]{0}', space=vmem, size = 0x400, scoped, tag = 'input window, operand 1, single buffered']
    #allocation6 [shape = 's32[1]{0}', space=sflag, size = 0x4, scoped, tag = 'scoped memory for tpu_custom_call.1']
    #allocation7 [shape = 'u8[65536]{0}', space=vmem, size = 0x10000, scoped, tag = 'input window, operand 3, single buffered']
    #allocation8 [shape = 'u8[8192]{0}', space=vmem, size = 0x2000, scoped, tag = 'output window, operand 0']
    %10 = vsyncpa [#allocation3], 0
    %s11 = scalar_lea.sflag [#allocation3], 1
    %12 = vsyncpa %s11, 0
    %13 = vsyncpa [#allocation6], 0
    %14 = vsyncpa [#allocation4], 0
    %s15 = scalar_lea.sflag [#allocation4], 1
    %16 = vsyncpa %s15, 0
    loop: start=0, step=1, limit=4
    $region2: #{tpu_custom_call.1} parent=1 // loop_pre_header
      _
    $region3: #{tpu_custom_call.1} parent=1 // loop_header
      %s18 = sphi 0, %s22
      %p19 = scmp.ge.s32.totalorder %s18, 4
      %s28 = sphi 0, %s30
      %s31 = sphi 0, %s28
      %s32 = sphi 0, %s31
      %s48 = sphi 0, %s32
      %s52 = sphi 0, %s52
      %s54 = sphi 0, %s52
      %s55 = sphi 0, %s54
      %s69 = sphi 0, %s55
      %s73 = sphi 0, %s73
      %s75 = sphi 0, %s73
      %s76 = sphi 0, %s75
      %s90 = sphi 0, %s76
      %s94 = sphi 0, %s94
      %s96 = sphi 0, %s94
      %s97 = sphi 0, %s96
      %s111 = sphi 0, %s97
      %s115 = sphi 0, %s115
      %s117 = sphi 0, %s115
      %s118 = sphi 0, %s117
      %s132 = sphi 0, %s118
      %s138 = sphi 0, %s140
      %s141 = sphi 0, %s138
      %s142 = sphi 0, %s141
      %s158 = sphi 0, %s142
    $region4: #{tpu_custom_call.1} parent=1 // loop_header_branch
      %21 = sbr.rel (%p19) target = $region8
    $region5: #{tpu_custom_call.1} parent=1 // loop_body
      %s23 = ssub.s32 %s18, 1
      %s24 = ssub.s32 %s18, 2
      %s25 = sadd.s32 %s18, 1
      %s26 = ssub.s32 %s18, %s25
      %p27 = scmp.eq.s32.totalorder %s26, 0
      %s29 = sadd.s32 %s28, 1
      %s30 = scalar_select %p27, %s28, %s29
      %p33 = pneg %p27
      %p34 = scmp.eq.s32.totalorder %s18, 1
      %p35 = por %p33, %p34
      %p36 = scmp.ne.s32.totalorder %s28, %s31
      %p37 = scmp.eq.s32.totalorder %s18, 0
      %p38 = por %p36, %p37
      %p39 = scmp.ne.s32.totalorder %s28, %s31
      %p40 = scmp.eq.s32.totalorder %s23, 1
      %p41 = por %p39, %p40
      %p42 = scmp.ne.s32.totalorder %s31, %s32
      %p43 = scmp.eq.s32.totalorder %s23, 0
      %p44 = por %p42, %p43
      %p45 = scmp.ne.s32.totalorder %s31, %s32
      %p46 = scmp.eq.s32.totalorder %s24, 1
      %p47 = por %p45, %p46
      %p49 = scmp.ne.s32.totalorder %s32, %s48
      %p50 = scmp.eq.s32.totalorder %s24, 0
      %p51 = por %p49, %p50
      %s53 = sadd.s32 %s52, 1
      %p56 = scmp.eq.s32.totalorder %s18, 1
      %p57 = scmp.ne.s32.totalorder %s52, %s54
      %p58 = scmp.eq.s32.totalorder %s18, 0
      %p59 = por %p57, %p58
      %p60 = scmp.ne.s32.totalorder %s52, %s54
      %p61 = scmp.eq.s32.totalorder %s23, 1
      %p62 = por %p60, %p61
      %p63 = scmp.ne.s32.totalorder %s54, %s55
      %p64 = scmp.eq.s32.totalorder %s23, 0
      %p65 = por %p63, %p64
      %p66 = scmp.ne.s32.totalorder %s54, %s55
      %p67 = scmp.eq.s32.totalorder %s24, 1
      %p68 = por %p66, %p67
      %p70 = scmp.ne.s32.totalorder %s55, %s69
      %p71 = scmp.eq.s32.totalorder %s24, 0
      %p72 = por %p70, %p71
      %s74 = sadd.s32 %s73, 1
      %p77 = scmp.eq.s32.totalorder %s18, 1
      %p78 = scmp.ne.s32.totalorder %s73, %s75
      %p79 = scmp.eq.s32.totalorder %s18, 0
      %p80 = por %p78, %p79
      %p81 = scmp.ne.s32.totalorder %s73, %s75
      %p82 = scmp.eq.s32.totalorder %s23, 1
      %p83 = por %p81, %p82
      %p84 = scmp.ne.s32.totalorder %s75, %s76
      %p85 = scmp.eq.s32.totalorder %s23, 0
      %p86 = por %p84, %p85
      %p87 = scmp.ne.s32.totalorder %s75, %s76
      %p88 = scmp.eq.s32.totalorder %s24, 1
      %p89 = por %p87, %p88
      %p91 = scmp.ne.s32.totalorder %s76, %s90
      %p92 = scmp.eq.s32.totalorder %s24, 0
      %p93 = por %p91, %p92
      %s95 = sadd.s32 %s94, 1
      %p98 = scmp.eq.s32.totalorder %s18, 1
      %p99 = scmp.ne.s32.totalorder %s94, %s96
      %p100 = scmp.eq.s32.totalorder %s18, 0
      %p101 = por %p99, %p100
      %p102 = scmp.ne.s32.totalorder %s94, %s96
      %p103 = scmp.eq.s32.totalorder %s23, 1
      %p104 = por %p102, %p103
      %p105 = scmp.ne.s32.totalorder %s96, %s97
      %p106 = scmp.eq.s32.totalorder %s23, 0
      %p107 = por %p105, %p106
      %p108 = scmp.ne.s32.totalorder %s96, %s97
      %p109 = scmp.eq.s32.totalorder %s24, 1
      %p110 = por %p108, %p109
      %p112 = scmp.ne.s32.totalorder %s97, %s111
      %p113 = scmp.eq.s32.totalorder %s24, 0
      %p114 = por %p112, %p113
      %s116 = sadd.s32 %s115, 1
      %p119 = scmp.eq.s32.totalorder %s18, 1
      %p120 = scmp.ne.s32.totalorder %s115, %s117
      %p121 = scmp.eq.s32.totalorder %s18, 0
      %p122 = por %p120, %p121
      %p123 = scmp.ne.s32.totalorder %s115, %s117
      %p124 = scmp.eq.s32.totalorder %s23, 1
      %p125 = por %p123, %p124
      %p126 = scmp.ne.s32.totalorder %s117, %s118
      %p127 = scmp.eq.s32.totalorder %s23, 0
      %p128 = por %p126, %p127
      %p129 = scmp.ne.s32.totalorder %s117, %s118
      %p130 = scmp.eq.s32.totalorder %s24, 1
      %p131 = por %p129, %p130
      %p133 = scmp.ne.s32.totalorder %s118, %s132
      %p134 = scmp.eq.s32.totalorder %s24, 0
      %p135 = por %p133, %p134
      %s136 = ssub.s32 %s18, %s25
      %p137 = scmp.eq.s32.totalorder %s136, 0
      %s139 = sadd.s32 %s138, 1
      %s140 = scalar_select %p137, %s138, %s139
      %p143 = pneg %p137
      %p144 = scmp.eq.s32.totalorder %s18, 1
      %p145 = por %p143, %p144
      %p146 = scmp.ne.s32.totalorder %s138, %s141
      %p147 = scmp.eq.s32.totalorder %s18, 0
      %p148 = por %p146, %p147
      %p149 = scmp.ne.s32.totalorder %s138, %s141
      %p150 = scmp.eq.s32.totalorder %s23, 1
      %p151 = por %p149, %p150
      %p152 = scmp.ne.s32.totalorder %s141, %s142
      %p153 = scmp.eq.s32.totalorder %s23, 0
      %p154 = por %p152, %p153
      %p155 = scmp.ne.s32.totalorder %s141, %s142
      %p156 = scmp.eq.s32.totalorder %s24, 1
      %p157 = por %p155, %p156
      %p159 = scmp.ne.s32.totalorder %s142, %s158
      %p160 = scmp.eq.s32.totalorder %s24, 0
      %p161 = por %p159, %p160
      %p162 = scmp.le.s32.totalorder 1, %s18
      %p163 = scmp.lt.s32.totalorder %s18, 3
      %p164 = pnand %p162, %p163
      %p165 = pneg %p164
      // Predicated region
      $region9: #{tpu_custom_call.1} parent=5 // pred_check
        _
      $region10: #{tpu_custom_call.1} parent=5 // pred_check_branch
        %167 = sbr.rel (%p164) target = $region12
      $region11: #{tpu_custom_call.1} parent=5 // pred_region
        %s168 = ssub.s32 %s18, 1
        // Predicated region
        $region13: #{tpu_custom_call.1} parent=11 // pred_check
          %p169 = pneg %p65
        $region14: #{tpu_custom_call.1} parent=11 // pred_check_branch
          %171 = sbr.rel (%p169) target = $region16
        $region15: #{tpu_custom_call.1} parent=11 // pred_region
          %173 = vsyncadd [#allocation6], 0
          %s175 = sshll.u32 %s1, 4
          %s176 = int_to_ptr.hbm [resolvable:$true] %s175
          %s177 = sshll.u32 [#allocation5], 4
          %s178 = int_to_ptr.vmem [resolvable:$true] %s177
          %180 = dma.hbm_to_vmem [thread:$0]  %s176, 16, %s178, [#allocation6]
        $region16: #{tpu_custom_call.1} parent=11 // pred_fallthru
          _
        // Predicated region
        $region17: #{tpu_custom_call.1} parent=11 // pred_check
          %p181 = pneg %p86
        $region18: #{tpu_custom_call.1} parent=11 // pred_check_branch
          %183 = sbr.rel (%p181) target = $region20
        $region19: #{tpu_custom_call.1} parent=11 // pred_region
          _
        $region20: #{tpu_custom_call.1} parent=11 // pred_fallthru
          _
        // Predicated region
        $region21: #{tpu_custom_call.1} parent=11 // pred_check
          %p184 = pneg %p107
        $region22: #{tpu_custom_call.1} parent=11 // pred_check_branch
          %186 = sbr.rel (%p184) target = $region24
        $region23: #{tpu_custom_call.1} parent=11 // pred_region
          %188 = vsyncadd [#allocation6], 0
          %s189 = sshll.u32 %s3, 4
          %s190 = int_to_ptr.hbm [resolvable:$true] %s189
          %s191 = sshll.u32 [#allocation7], 4
          %s192 = int_to_ptr.vmem [resolvable:$true] %s191
          %197 = dma.hbm_to_vmem [thread:$0]  %s190, 2048, %s192, [#allocation6], 128, 128, 8
        $region24: #{tpu_custom_call.1} parent=11 // pred_fallthru
          _
        // Predicated region
        $region25: #{tpu_custom_call.1} parent=11 // pred_check
          %p198 = pneg %p128
        $region26: #{tpu_custom_call.1} parent=11 // pred_check_branch
          %200 = sbr.rel (%p198) target = $region28
        $region27: #{tpu_custom_call.1} parent=11 // pred_region
          _
        $region28: #{tpu_custom_call.1} parent=11 // pred_fallthru
          _
      $region12: #{tpu_custom_call.1} parent=5 // pred_fallthru
        _
      %p201 = scmp.lt.s32.totalorder %s18, 2
      // Predicated region
      $region29: #{tpu_custom_call.1} parent=5 // pred_check
        %p202 = pneg %p201
      $region30: #{tpu_custom_call.1} parent=5 // pred_check_branch
        %204 = sbr.rel (%p202) target = $region32
      $region31: #{tpu_custom_call.1} parent=5 // pred_region
        // Predicated region
        $region33: #{tpu_custom_call.1} parent=31 // pred_check
          %p205 = pneg %p38
        $region34: #{tpu_custom_call.1} parent=31 // pred_check_branch
          %207 = sbr.rel (%p205) target = $region36
        $region35: #{tpu_custom_call.1} parent=31 // pred_region
          %s208 = sand.u32 %s28, 1
          %s209 = scalar_lea.sflag [#allocation3], %s208
          %s210 = sand.u32 %s28, 1
          %s211 = smul.addr %s210, 8
          %s212 = scalar_lea.vmem [#allocation2], %s211
          %214 = vsyncadd %s209, 0
          %s215 = smul.addr %s18, 8
          %s216 = scalar_lea.hbm %s0, %s215
          %s218 = sshll.u32 %s216, 4
          %s219 = int_to_ptr.hbm [resolvable:$true] %s218
          %s220 = sshll.u32 %s212, 4
          %s221 = int_to_ptr.vmem [resolvable:$true] %s220
          %223 = dma.hbm_to_vmem [thread:$0]  %s219, 128, %s221, %s209
        $region36: #{tpu_custom_call.1} parent=31 // pred_fallthru
          _
      $region32: #{tpu_custom_call.1} parent=5 // pred_fallthru
        _
      %p224 = scmp.le.s32.totalorder 1, %s18
      %p225 = scmp.lt.s32.totalorder %s18, 3
      %p226 = pnand %p224, %p225
      %p227 = pneg %p226
      // Predicated region
      $region37: #{tpu_custom_call.1} parent=5 // pred_check
        _
      $region38: #{tpu_custom_call.1} parent=5 // pred_check_branch
        %229 = sbr.rel (%p226) target = $region40
      $region39: #{tpu_custom_call.1} parent=5 // pred_region
        %s230 = ssub.s32 %s18, 1
        %s231 = sand.u32 %s31, 1
        %s232 = scalar_lea.sflag [#allocation3], %s231
        %s233 = sand.u32 %s31, 1
        %s234 = smul.addr %s233, 8
        %s235 = scalar_lea.vmem [#allocation2], %s234
        // Predicated region
        $region41: #{tpu_custom_call.1} parent=39 // pred_check
          %p236 = pneg %p44
        $region42: #{tpu_custom_call.1} parent=39 // pred_check_branch
          %238 = sbr.rel (%p236) target = $region44
        $region43: #{tpu_custom_call.1} parent=39 // pred_region
          %240 = dma.done %s232, 128
        $region44: #{tpu_custom_call.1} parent=39 // pred_fallthru
          _
        // Predicated region
        $region45: #{tpu_custom_call.1} parent=39 // pred_check
          %p241 = pneg %p65
        $region46: #{tpu_custom_call.1} parent=39 // pred_check_branch
          %243 = sbr.rel (%p241) target = $region48
        $region47: #{tpu_custom_call.1} parent=39 // pred_region
          %245 = dma.done [#allocation6], 16
        $region48: #{tpu_custom_call.1} parent=39 // pred_fallthru
          _
        // Predicated region
        $region49: #{tpu_custom_call.1} parent=39 // pred_check
          %p246 = pneg %p107
        $region50: #{tpu_custom_call.1} parent=39 // pred_check_branch
          %248 = sbr.rel (%p246) target = $region52
        $region51: #{tpu_custom_call.1} parent=39 // pred_region
          %250 = dma.done [#allocation6], 2048
        $region52: #{tpu_custom_call.1} parent=39 // pred_fallthru
          _
        %s251 = sand.u32 %s31, 1
        %s252 = scalar_lea.sflag [#allocation3], %s251
        %s253 = sand.u32 %s31, 1
        %s254 = smul.addr %s253, 8
        %s255 = scalar_lea.vmem [#allocation2], %s254
        %p256 = pneg %p44
        %p257 = pneg %p41
        %p258 = pneg %p65
        %p259 = pneg %p62
        %p260 = pneg %p86
        %p261 = pneg %p83
        %p262 = pneg %p107
        %p263 = pneg %p104
        %p264 = pneg %p128
        %p265 = pneg %p125
        %p266 = pneg %p154
        %p267 = pneg %p151
        %s268 = sand.u32 %s141, 1
        %s269 = scalar_lea.sflag [#allocation4], %s268
        %s270 = sand.u32 %s141, 1
        %s271 = smul.addr %s270, 8
        %s272 = scalar_lea.vmem [#allocation8], %s271
        %v273 = vld [vmem:[%s235] sm:$0xff]
        %v274 = vld [vmem:[#allocation5] sm:$0x1]
        %v275 = vld [vmem:[%s2] sm:$0x1]
        %276 = vadd.xlane.f32.xlu0 %v273
        %v277 = vpop.xlane.xlu0 %276
        %v278 = vmul.f32 %v277, 0.03125
        %v279 = vsub.f32 %v273, %v278
        %v280 = vlaneseq
        %v281 = vand.u32 %v280, 127
        %vm282 = vcmp.lt.s32.totalorder %v281, 32
        %v283 = vsel %vm282, %v279, 0.0
        %v284 = vmul.f32 %v283, %v283
        %285 = vadd.xlane.f32.xlu0 %v284
        %v286 = vpop.xlane.xlu0 %285
        %v287 = vmul.f32 %v286, 0.03125
        %v288 = vadd.f32 %v287, 1e-05
        %v289 = vrsqrt.pop %v288
        %v290 = vmul.f32 %v289, %v288
        %v291 = vmul.f32 %v290, %v289
        %v292 = vmul.f32 0.5, %v291
        %v293 = vsub.f32 1.5, %v292
        %v294 = vmul.f32 %v289, %v293
        %vm295 = vweird.f32 %v288
        %vm296 = vweird.f32 %v289
        %vm297 = vmor %vm295, %vm296
        %v298 = vsel %vm297, %v289, %v294
        %v299 = vmul.f32 %v283, %v298
        %v301 = vperm.slane %v274, 0
        %v303 = vmul.f32 %v299, %v301
        %v305 = vperm.slane %v275, 0
        %v307 = vadd.f32 %v303, %v305
        %v308 = vld [vmem:[#allocation7] sm:$0xff]
        %v309 = vld [vmem:[#allocation7 + $0x8] sm:$0xff]
        %v310 = vld [vmem:[#allocation7 + $0x10] sm:$0xff]
        %v311 = vld [vmem:[#allocation7 + $0x18] sm:$0xff]
        %v312 = vld [vmem:[#allocation7 + $0x20] sm:$0xff]
        %v313 = vld [vmem:[#allocation7 + $0x28] sm:$0xff]
        %v314 = vld [vmem:[#allocation7 + $0x30] sm:$0xff]
        %v315 = vld [vmem:[#allocation7 + $0x38] sm:$0xff]
        %v316 = vld [vmem:[#allocation7 + $0x40] sm:$0xff]
        %v317 = vld [vmem:[#allocation7 + $0x48] sm:$0xff]
        %v318 = vld [vmem:[#allocation7 + $0x50] sm:$0xff]
        %v319 = vld [vmem:[#allocation7 + $0x58] sm:$0xff]
        %v320 = vld [vmem:[#allocation7 + $0x60] sm:$0xff]
        %v321 = vld [vmem:[#allocation7 + $0x68] sm:$0xff]
        %v322 = vld [vmem:[#allocation7 + $0x70] sm:$0xff]
        %v323 = vld [vmem:[#allocation7 + $0x78] sm:$0xff]
        %v324 = vld [vmem:[%s4] sm:$0x1]
        %v326 = vperm.slane %v324, 0
        %328 = vmatpush.msra.mxu0 %v323
        %329 = vmatpush.msra.mxu0 %v322
        %330 = vmatpush.msra.mxu0 %v321
        %331 = vmatpush.msra.mxu0 %v320
        %332 = vmatpush.msra.mxu0 %v319
        %333 = vmatpush.msra.mxu0 %v318
        %334 = vmatpush.msra.mxu0 %v317
        %335 = vmatpush.msra.mxu0 %v316
        %336 = vmatpush.msra.mxu0 %v315
        %337 = vmatpush.msra.mxu0 %v314
        %338 = vmatpush.msra.mxu0 %v313
        %339 = vmatpush.msra.mxu0 %v312
        %340 = vmatpush.msra.mxu0 %v311
        %341 = vmatpush.msra.mxu0 %v310
        %342 = vmatpush.msra.mxu0 %v309
        %343 = vmatpush.msra.mxu0 %v308
        %344 = vmatmul.f32.gmra.mxu0 %v307
        %v345 = vpop.f32.mrf.mxu0
        %v346 = vadd.f32 %v326, %v345
        %347 = vdwg.mxu0
        %348 = vst [vmem:[%s272] sm:$0xff] %v346
        %s349 = sand.u32 %s141, 1
        %s350 = scalar_lea.sflag [#allocation4], %s349
        %s351 = sand.u32 %s141, 1
        %s352 = smul.addr %s351, 8
        %s353 = scalar_lea.vmem [#allocation8], %s352
        // Predicated region
        $region53: #{tpu_custom_call.1} parent=39 // pred_check
          %p354 = pneg %p151
        $region54: #{tpu_custom_call.1} parent=39 // pred_check_branch
          %356 = sbr.rel (%p354) target = $region56
        $region55: #{tpu_custom_call.1} parent=39 // pred_region
          %358 = vsyncadd %s350, 0
          %s359 = smul.addr %s23, 8
          %s360 = scalar_lea.hbm %s5, %s359
          %s362 = sshll.u32 %s353, 4
          %s363 = int_to_ptr.vmem [resolvable:$true] %s362
          %s364 = sshll.u32 %s360, 4
          %s365 = int_to_ptr.hbm [resolvable:$true] %s364
          %367 = dma.vmem_to_hbm [thread:$0]  %s363, 128, %s365, %s350
        $region56: #{tpu_custom_call.1} parent=39 // pred_fallthru
          _
      $region40: #{tpu_custom_call.1} parent=5 // pred_fallthru
        _
      %p368 = scmp.le.s32.totalorder 2, %s18
      // Predicated region
      $region57: #{tpu_custom_call.1} parent=5 // pred_check
        %p369 = pneg %p368
      $region58: #{tpu_custom_call.1} parent=5 // pred_check_branch
        %371 = sbr.rel (%p369) target = $region60
      $region59: #{tpu_custom_call.1} parent=5 // pred_region
        %s372 = ssub.s32 %s18, 2
        // Predicated region
        $region61: #{tpu_custom_call.1} parent=59 // pred_check
          %p373 = pneg %p157
        $region62: #{tpu_custom_call.1} parent=59 // pred_check_branch
          %375 = sbr.rel (%p373) target = $region64
        $region63: #{tpu_custom_call.1} parent=59 // pred_region
          %s376 = sand.u32 %s142, 1
          %s377 = scalar_lea.sflag [#allocation4], %s376
          %s378 = sand.u32 %s142, 1
          %s379 = smul.addr %s378, 8
          %s380 = scalar_lea.vmem [#allocation8], %s379
          %382 = dma.done %s377, 128
        $region64: #{tpu_custom_call.1} parent=59 // pred_fallthru
          _
      $region60: #{tpu_custom_call.1} parent=5 // pred_fallthru
        _
    $region6: #{tpu_custom_call.1} parent=1 // loop_footer
      %s22 = sadd.s32 1, %s18
    $region7: #{tpu_custom_call.1} parent=1 // loop_footer_branch
      %17 = sbr.rel target = $region3
    $region8: #{tpu_custom_call.1} parent=1 // loop_exit
      _
    %383 = vsyncpa [#allocation3], 1
    %s384 = scalar_lea.sflag [#allocation3], 1
    %385 = vsyncpa %s384, 1
    %386 = vsyncpa [#allocation6], 1
    %387 = vsyncpa [#allocation4], 1
    %s388 = scalar_lea.sflag [#allocation4], 1
    %389 = vsyncpa %s388, 1

</llo_original>
